<compile_context>
chip_gen: v6e
topology: v6e:2x2x1
jax: 0.10.0
libtpu: 0.0.40
codegen_flags: <defaults>
</compile_context>

<pallas_src>
import functools

import jax
import jax.numpy as jnp
from jax.experimental import pallas as pl
from jax.experimental.pallas import tpu as pltpu


def conv_relu_kernel(x_ref, w_ref, b_ref, o_ref, lhs_ref):
    # x_ref:   (B, H, CW)        B input images, CW = Cin*W (lane axis)
    # w_ref:   (3*CW, W*Cout)    block-Toeplitz conv weights, K = (kh, cin, w)
    # b_ref:   (1, W*Cout)       bias tiled along width (lane-dense)
    # o_ref:   (B, H, W*Cout)    lane-dense output block
    # lhs_ref: VMEM scratch (B*H, 3*CW) -- im2col matrix for this block
    B, H, CW = x_ref.shape
    zero_row = jnp.zeros((1, CW), dtype=lhs_ref.dtype)

    for b in range(B):
        base = b * H
        xb = x_ref[b]  # (H, CW)

        # kh = 0: output row h reads input row h-1 (row 0 is the top halo).
        lhs_ref[base:base + 1, 0:CW] = zero_row
        lhs_ref[base + 1:base + H, 0:CW] = xb[0:H - 1, :]

        # kh = 1: output row h reads input row h.
        lhs_ref[base:base + H, CW:2 * CW] = xb

        # kh = 2: output row h reads input row h+1 (row H-1 is the bottom halo).
        lhs_ref[base:base + H - 1, 2 * CW:3 * CW] = xb[1:H, :]
        lhs_ref[base + H - 1:base + H, 2 * CW:3 * CW] = zero_row

    # One MXU matmul: (B*H, 3*CW) @ (3*CW, W*Cout) -> (B*H, W*Cout), f32 acc.
    acc = jnp.dot(lhs_ref[...], w_ref[...], preferred_element_type=jnp.float32)
    acc = jnp.maximum(acc + b_ref[...], 0.0)   # bias + ReLU, full 128 lanes
    o_ref[...] = acc.reshape(B, H, -1).astype(o_ref.dtype)


def _toeplitz_weights(weight, W):
    """(Cout, Cin, 3, 3) OIHW conv weights -> (3*Cin*W, W*Cout) matrix.

    Row index = kh*Cin*W + cin*W + wp  (tap row kh, channel cin, input col wp)
    Col index = wo*Cout + cout         (output column wo, output channel cout)
    Entries outside the 3-tap band are zero, which realizes the width padding.
    """
    Cout, Cin, KH, KW = weight.shape
    wp = jnp.arange(W)
    wo = jnp.arange(W)
    kw_idx = wp[:, None] - wo[None, :] + 1                  # (Wp, Wo)
    valid = (kw_idx >= 0) & (kw_idx < KW)
    kw_safe = jnp.clip(kw_idx, 0, KW - 1)
    g = weight[:, :, :, kw_safe]                            # (Cout, Cin, KH, Wp, Wo)
    g = jnp.where(valid[None, None, None, :, :], g, 0.0)
    g = jnp.transpose(g, (2, 1, 3, 4, 0))                   # (KH, Cin, Wp, Wo, Cout)
    return g.reshape(KH * Cin * W, W * Cout)


def prepare_conv_relu_params(weight, bias, W):
    """Precompute (once, outside the hot path) the Toeplitz weights + tiled bias."""
    Cout = weight.shape[0]
    w_mat = _toeplitz_weights(weight.astype(jnp.float32), W)        # (3*Cin*W, W*Cout)
    b_tiled = jnp.tile(bias.astype(jnp.float32), W).reshape(1, W * Cout)
    return w_mat, b_tiled


def _pick_block_b(N, H):
    """Images per grid step: target M = B*H ~ 256 (v6e/v7x MXU), but keep the
    grid length >= 2 so both v7x TensorCores get work. Returns a divisor of N."""
    target = max(1, 256 // H)
    if N >= 2:
        target = min(target, -(-N // 2))    # ceil(N/2) -> grid length >= 2
    for b in range(min(target, N), 0, -1):
        if N % b == 0:
            return b
    return 1


@functools.partial(jax.jit, static_argnames=("nchw_output",))
def conv_relu(x_nchw, w_mat, b_tiled, nchw_output=True):
    """x_nchw: (N, Cin, H, W); w_mat: (3*Cin*W, W*Cout); b_tiled: (1, W*Cout)."""
    N, Cin, H, W = x_nchw.shape
    CW = Cin * W               # 64  (lane axis of the input block)
    K = 3 * CW                 # 192 (matmul K)
    WCout = b_tiled.shape[1]   # 128 -> lane-dense output
    Cout = WCout // W

    B = _pick_block_b(N, H)    # images per grid step (N=2, H=16 -> B=1, grid=2)
    grid = N // B

    # One-time relayout: (N, Cin, H, W) -> (N, H, Cin*W) so the im2col becomes
    # contiguous 64-lane copies inside the kernel. Tiny HBM pass (~8 KB here).
    x_hcw = jnp.transpose(x_nchw, (0, 2, 1, 3)).reshape(N, H, CW)

    cost = pl.CostEstimate(
        flops=2 * N * H * K * WCout,
        transcendentals=0,
        bytes_accessed=(x_hcw.size + w_mat.size + b_tiled.size + N * H * WCout) * 4,
    )

    out_lane = pl.pallas_call(
        conv_relu_kernel,
        out_shape=jax.ShapeDtypeStruct((N, H, WCout), x_nchw.dtype),
        grid_spec=pltpu.PrefetchScalarGridSpec(
            num_scalar_prefetch=0,
            grid=(grid,),
            in_specs=[
                pl.BlockSpec((B, H, CW), lambda n: (n, 0, 0)),
                pl.BlockSpec((K, WCout), lambda n: (0, 0)),
                pl.BlockSpec((1, WCout), lambda n: (0, 0)),
            ],
            out_specs=pl.BlockSpec((B, H, WCout), lambda n: (n, 0, 0)),
            scratch_shapes=[pltpu.VMEM((B * H, K), x_nchw.dtype)],
        ),
        compiler_params=pltpu.CompilerParams(
            dimension_semantics=("parallel",),
        ),
        cost_estimate=cost,
    )(x_hcw, w_mat, b_tiled)

    out_nhwc = out_lane.reshape(N, H, W, Cout)
    if nchw_output:
        # PyTorch NCHW convention; drop (nchw_output=False) if the consumer can
        # take channels-last to save one HBM round trip.
        return jnp.transpose(out_nhwc, (0, 3, 1, 2))
    return out_nhwc


if __name__ == "__main__":
    # ConvRelu(in_=4, out=8), input (N=2, Cin=4, H=16, W=16)
    N, Cin, Cout, H, W = 2, 4, 8, 16, 16

    key = jax.random.PRNGKey(0)
    kx, kw, kb = jax.random.split(key, 3)

    x = jax.random.normal(kx, (N, Cin, H, W), dtype=jnp.float32)
    # Deterministic parameter init (Conv2d(4, 8, 3, padding=1) shapes).
    fan_in = Cin * 3 * 3
    bound = 1.0 / jnp.sqrt(fan_in)
    weight = jax.random.uniform(
        kw, (Cout, Cin, 3, 3), dtype=jnp.float32, minval=-bound, maxval=bound
    )
    bias = jax.random.uniform(
        kb, (Cout,), dtype=jnp.float32, minval=-bound, maxval=bound
    )

    # Precompute static parameters once (not per forward call).
    w_mat, b_tiled = prepare_conv_relu_params(weight, bias, W)
    w_mat = jax.block_until_ready(w_mat)
    b_tiled = jax.block_until_ready(b_tiled)

    out = conv_relu(x, w_mat, b_tiled)
    out = jax.block_until_ready(out)

    # Reference: XLA conv (NCHW, OIHW) + ReLU, same semantics as nn.Conv2d.
    ref = jax.lax.conv_general_dilated(
        x, weight, window_strides=(1, 1), padding=((1, 1), (1, 1)),
        dimension_numbers=("NCHW", "OIHW", "NCHW"),
    ) + bias[None, :, None, None]
    ref = jnp.maximum(ref, 0.0)

    assert out.shape == (N, Cout, H, W)
    assert jnp.allclose(out, ref, rtol=1e-4, atol=1e-4)
    print("KERNEL_OK")
</pallas_src>

<mosaic_0001>
module attributes {stable_mosaic.version = 11 : i64} {
  func.func @conv_relu_kernel(%arg0: i32, %arg1: memref<1x16x64xf32, #tpu.memory_space<vmem>>, %arg2: memref<192x128xf32, #tpu.memory_space<vmem>>, %arg3: memref<1x128xf32, #tpu.memory_space<vmem>>, %arg4: memref<1x16x128xf32, #tpu.memory_space<vmem>>, %arg5: memref<16x192xf32, #tpu.memory_space<vmem>>) attributes {dimension_semantics = [#tpu.dimension_semantics<parallel>], iteration_bounds = array<i64: 2>, scalar_prefetch = 0 : i64, scratch_operands = 1 : i64, tpu.core_type = #tpu.core_type<tc>, window_params = [{transform_indices = @transform_0, window_bounds = array<i64: 1, 16, 64>}, {pipeline_mode = #tpu.pipeline_mode<synchronous>, transform_indices = @transform_1, window_bounds = array<i64: 192, 128>}, {pipeline_mode = #tpu.pipeline_mode<synchronous>, transform_indices = @transform_2, window_bounds = array<i64: 1, 128>}, {transform_indices = @transform_3, window_bounds = array<i64: 1, 16, 128>}]} {
    %cst = arith.constant 0.000000e+00 : f32
    %0 = vector.broadcast %cst : f32 to vector<1x64xf32>
    %c0 = arith.constant 0 : index
    %c0_0 = arith.constant 0 : index
    %c0_1 = arith.constant 0 : index
    %1 = vector.load %arg1[%c0, %c0_0, %c0_1] : memref<1x16x64xf32, #tpu.memory_space<vmem>>, vector<1x16x64xf32>
    %2 = vector.shape_cast %1 : vector<1x16x64xf32> to vector<16x64xf32>
    %c0_2 = arith.constant 0 : index
    %c0_3 = arith.constant 0 : index
    %3 = vector.load %arg5[%c0_2, %c0_3] : memref<16x192xf32, #tpu.memory_space<vmem>>, vector<1x64xf32>
    tpu.vector_store %arg5[%c0_2, %c0_3], %0 {strides = array<i32>} : memref<16x192xf32, #tpu.memory_space<vmem>>, vector<1x64xf32>,
    %4 = vector.extract_strided_slice %2 {offsets = [0, 0], sizes = [15, 64], strides = [1, 1]} : vector<16x64xf32> to vector<15x64xf32>
    %c1 = arith.constant 1 : index
    %c0_4 = arith.constant 0 : index
    %5 = vector.load %arg5[%c1, %c0_4] : memref<16x192xf32, #tpu.memory_space<vmem>>, vector<15x64xf32>
    tpu.vector_store %arg5[%c1, %c0_4], %4 {strides = array<i32>} : memref<16x192xf32, #tpu.memory_space<vmem>>, vector<15x64xf32>,
    %c0_5 = arith.constant 0 : index
    %c64 = arith.constant 64 : index
    %6 = vector.load %arg5[%c0_5, %c64] : memref<16x192xf32, #tpu.memory_space<vmem>>, vector<16x64xf32>
    tpu.vector_store %arg5[%c0_5, %c64], %2 {strides = array<i32>} : memref<16x192xf32, #tpu.memory_space<vmem>>, vector<16x64xf32>,
    %7 = vector.extract_strided_slice %2 {offsets = [1, 0], sizes = [15, 64], strides = [1, 1]} : vector<16x64xf32> to vector<15x64xf32>
    %c0_6 = arith.constant 0 : index
    %c128 = arith.constant 128 : index
    %8 = vector.load %arg5[%c0_6, %c128] : memref<16x192xf32, #tpu.memory_space<vmem>>, vector<15x64xf32>
    tpu.vector_store %arg5[%c0_6, %c128], %7 {strides = array<i32>} : memref<16x192xf32, #tpu.memory_space<vmem>>, vector<15x64xf32>,
    %c15 = arith.constant 15 : index
    %c128_7 = arith.constant 128 : index
    %9 = vector.load %arg5[%c15, %c128_7] : memref<16x192xf32, #tpu.memory_space<vmem>>, vector<1x64xf32>
    tpu.vector_store %arg5[%c15, %c128_7], %0 {strides = array<i32>} : memref<16x192xf32, #tpu.memory_space<vmem>>, vector<1x64xf32>,
    %c0_8 = arith.constant 0 : index
    %c0_9 = arith.constant 0 : index
    %10 = vector.load %arg5[%c0_8, %c0_9] : memref<16x192xf32, #tpu.memory_space<vmem>>, vector<16x192xf32>
    %c0_10 = arith.constant 0 : index
    %c0_11 = arith.constant 0 : index
    %11 = vector.load %arg2[%c0_10, %c0_11] : memref<192x128xf32, #tpu.memory_space<vmem>>, vector<192x128xf32>
    %cst_12 = arith.constant dense<0.000000e+00> : vector<16x128xf32>
    %12 = tpu.matmul %10, %11, %cst_12 {dimension_numbers = #tpu.dot_dimension_numbers<[1], [0], [0], [1], [0, 0, 1, 1], [], []>} : vector<16x192xf32>, vector<192x128xf32>, vector<16x128xf32> -> vector<16x128xf32>
    %c0_13 = arith.constant 0 : index
    %c0_14 = arith.constant 0 : index
    %13 = vector.load %arg3[%c0_13, %c0_14] : memref<1x128xf32, #tpu.memory_space<vmem>>, vector<1x128xf32>
    %14 = vector.broadcast %13 : vector<1x128xf32> to vector<16x128xf32>
    %15 = arith.addf %12, %14 : vector<16x128xf32>
    %cst_15 = arith.constant 0.000000e+00 : f32
    %16 = vector.broadcast %cst_15 : f32 to vector<16x128xf32>
    %17 = arith.maximumf %15, %16 : vector<16x128xf32>
    %18 = vector.shape_cast %17 : vector<16x128xf32> to vector<1x16x128xf32>
    %c0_16 = arith.constant 0 : index
    %c0_17 = arith.constant 0 : index
    %c0_18 = arith.constant 0 : index
    %19 = vector.load %arg4[%c0_16, %c0_17, %c0_18] : memref<1x16x128xf32, #tpu.memory_space<vmem>>, vector<1x16x128xf32>
    tpu.vector_store %arg4[%c0_16, %c0_17, %c0_18], %18 {strides = array<i32>} : memref<1x16x128xf32, #tpu.memory_space<vmem>>, vector<1x16x128xf32>,
    return
  }
  func.func @transform_0(%arg0: i32) -> (i32, i32, i32) {
    %c0_i32 = arith.constant 0 : i32
    %c0_i32_0 = arith.constant 0 : i32
    %c0_i32_1 = arith.constant 0 : i32
    return %arg0, %c0_i32, %c0_i32_0 : i32, i32, i32
  }
  func.func @transform_1(%arg0: i32) -> (i32, i32) {
    %c0_i32 = arith.constant 0 : i32
    %c0_i32_0 = arith.constant 0 : i32
    %c0_i32_1 = arith.constant 0 : i32
    return %c0_i32, %c0_i32_0 : i32, i32
  }
  func.func @transform_2(%arg0: i32) -> (i32, i32) {
    %c0_i32 = arith.constant 0 : i32
    %c0_i32_0 = arith.constant 0 : i32
    %c0_i32_1 = arith.constant 0 : i32
    return %c0_i32, %c0_i32_0 : i32, i32
  }
  func.func @transform_3(%arg0: i32) -> (i32, i32, i32) {
    %c0_i32 = arith.constant 0 : i32
    %c0_i32_0 = arith.constant 0 : i32
    %c0_i32_1 = arith.constant 0 : i32
    return %arg0, %c0_i32, %c0_i32_0 : i32, i32, i32
  }
}

</mosaic_0001>

<llo_original>
// kernel: conv_relu.1
$region0: #{conv_relu.1}
  #allocation0 [shape = 'u32[]', space=smem, size = 0x4, offset = 0x4, fixed_abs, tag = 'smem constant byte address 0x4 - core index']
  #allocation1 [shape = 'u32[144,128]{1,0:T(1,128)}', space=vmem, size = 0x12000, scoped, tag = 'internal scratch']
  #allocation2 [shape = 'f32[16,192]{1,0:T(8,128)}', space=vmem, size = 0x4000, scoped, tag = 'scratch operand']
  %s0 = inlined_call_operand.vmem [shape: f32[2,16,64], index: 0, kind: input, shape index: {}]
  %s1 = inlined_call_operand.vmem [shape: f32[192,128], index: 1, kind: input, shape index: {}]
  %s2 = inlined_call_operand.vmem [shape: f32[1,128], index: 2, kind: input, shape index: {}]
  %s3 = inlined_call_operand.vmem [shape: f32[2,16,128], index: 3, kind: output, shape index: {}]
  %s4 = sld [smem:[#allocation0]]
  $region45: #{conv_relu.1} parent=0
    _
  %s6 = ssub.s32 1, %s4
  %s7 = scalar_select 0, %s6, %s4
  loop: start=0, step=1, limit=4
  $region2: #{conv_relu.1} parent=0 // loop_pre_header
    _
  $region3: #{conv_relu.1} parent=0 // loop_header
    %s9 = sphi 0, %s13
    %p10 = scmp.ge.s32.totalorder %s9, 4
    %s19 = sphi 0, %s21
    %s22 = sphi 0, %s19
    %s23 = sphi 0, %s22
    %s39 = sphi 0, %s23
    %s43 = sphi 0, %s43
    %s45 = sphi 0, %s43
    %s46 = sphi 0, %s45
    %s60 = sphi 0, %s46
    %s64 = sphi 0, %s64
    %s66 = sphi 0, %s64
    %s67 = sphi 0, %s66
    %s81 = sphi 0, %s67
    %s87 = sphi 0, %s89
    %s90 = sphi 0, %s87
    %s91 = sphi 0, %s90
    %s107 = sphi 0, %s91
  $region4: #{conv_relu.1} parent=0 // loop_header_branch
    %12 = sbr.rel (%p10) target = $region8
  $region5: #{conv_relu.1} parent=0 // loop_body
    %s14 = ssub.s32 %s9, 1
    %s15 = ssub.s32 %s9, 2
    %s16 = sadd.s32 %s9, 1
    %s17 = ssub.s32 %s9, %s16
    %p18 = scmp.eq.s32.totalorder %s17, 0
    %s20 = sadd.s32 %s19, 1
    %s21 = scalar_select %p18, %s19, %s20
    %p24 = pneg %p18
    %p25 = scmp.eq.s32.totalorder %s9, 1
    %p26 = por %p24, %p25
    %p27 = scmp.ne.s32.totalorder %s19, %s22
    %p28 = scmp.eq.s32.totalorder %s9, 0
    %p29 = por %p27, %p28
    %p30 = scmp.ne.s32.totalorder %s19, %s22
    %p31 = scmp.eq.s32.totalorder %s14, 1
    %p32 = por %p30, %p31
    %p33 = scmp.ne.s32.totalorder %s22, %s23
    %p34 = scmp.eq.s32.totalorder %s14, 0
    %p35 = por %p33, %p34
    %p36 = scmp.ne.s32.totalorder %s22, %s23
    %p37 = scmp.eq.s32.totalorder %s15, 1
    %p38 = por %p36, %p37
    %p40 = scmp.ne.s32.totalorder %s23, %s39
    %p41 = scmp.eq.s32.totalorder %s15, 0
    %p42 = por %p40, %p41
    %s44 = sadd.s32 %s43, 1
    %p47 = scmp.eq.s32.totalorder %s9, 1
    %p48 = scmp.ne.s32.totalorder %s43, %s45
    %p49 = scmp.eq.s32.totalorder %s9, 0
    %p50 = por %p48, %p49
    %p51 = scmp.ne.s32.totalorder %s43, %s45
    %p52 = scmp.eq.s32.totalorder %s14, 1
    %p53 = por %p51, %p52
    %p54 = scmp.ne.s32.totalorder %s45, %s46
    %p55 = scmp.eq.s32.totalorder %s14, 0
    %p56 = por %p54, %p55
    %p57 = scmp.ne.s32.totalorder %s45, %s46
    %p58 = scmp.eq.s32.totalorder %s15, 1
    %p59 = por %p57, %p58
    %p61 = scmp.ne.s32.totalorder %s46, %s60
    %p62 = scmp.eq.s32.totalorder %s15, 0
    %p63 = por %p61, %p62
    %s65 = sadd.s32 %s64, 1
    %p68 = scmp.eq.s32.totalorder %s9, 1
    %p69 = scmp.ne.s32.totalorder %s64, %s66
    %p70 = scmp.eq.s32.totalorder %s9, 0
    %p71 = por %p69, %p70
    %p72 = scmp.ne.s32.totalorder %s64, %s66
    %p73 = scmp.eq.s32.totalorder %s14, 1
    %p74 = por %p72, %p73
    %p75 = scmp.ne.s32.totalorder %s66, %s67
    %p76 = scmp.eq.s32.totalorder %s14, 0
    %p77 = por %p75, %p76
    %p78 = scmp.ne.s32.totalorder %s66, %s67
    %p79 = scmp.eq.s32.totalorder %s15, 1
    %p80 = por %p78, %p79
    %p82 = scmp.ne.s32.totalorder %s67, %s81
    %p83 = scmp.eq.s32.totalorder %s15, 0
    %p84 = por %p82, %p83
    %s85 = ssub.s32 %s9, %s16
    %p86 = scmp.eq.s32.totalorder %s85, 0
    %s88 = sadd.s32 %s87, 1
    %s89 = scalar_select %p86, %s87, %s88
    %p92 = pneg %p86
    %p93 = scmp.eq.s32.totalorder %s9, 1
    %p94 = por %p92, %p93
    %p95 = scmp.ne.s32.totalorder %s87, %s90
    %p96 = scmp.eq.s32.totalorder %s9, 0
    %p97 = por %p95, %p96
    %p98 = scmp.ne.s32.totalorder %s87, %s90
    %p99 = scmp.eq.s32.totalorder %s14, 1
    %p100 = por %p98, %p99
    %p101 = scmp.ne.s32.totalorder %s90, %s91
    %p102 = scmp.eq.s32.totalorder %s14, 0
    %p103 = por %p101, %p102
    %p104 = scmp.ne.s32.totalorder %s90, %s91
    %p105 = scmp.eq.s32.totalorder %s15, 1
    %p106 = por %p104, %p105
    %p108 = scmp.ne.s32.totalorder %s91, %s107
    %p109 = scmp.eq.s32.totalorder %s15, 0
    %p110 = por %p108, %p109
    %p111 = scmp.le.s32.totalorder 1, %s9
    %p112 = scmp.lt.s32.totalorder %s9, 3
    %p113 = pnand %p111, %p112
    %p114 = pneg %p113
    // Predicated region
    $region9: #{conv_relu.1} parent=5 // pred_check
      _
    $region10: #{conv_relu.1} parent=5 // pred_check_branch
      %116 = sbr.rel (%p113) target = $region12
    $region11: #{conv_relu.1} parent=5 // pred_region
      %s117 = ssub.s32 %s9, 1
      // Predicated region
      $region13: #{conv_relu.1} parent=11 // pred_check
        %p118 = pneg %p56
      $region14: #{conv_relu.1} parent=11 // pred_check_branch
        %120 = sbr.rel (%p118) target = $region16
      $region15: #{conv_relu.1} parent=11 // pred_region
        _
      $region16: #{conv_relu.1} parent=11 // pred_fallthru
        _
      // Predicated region
      $region17: #{conv_relu.1} parent=11 // pred_check
        %p121 = pneg %p77
      $region18: #{conv_relu.1} parent=11 // pred_check_branch
        %123 = sbr.rel (%p121) target = $region20
      $region19: #{conv_relu.1} parent=11 // pred_region
        _
      $region20: #{conv_relu.1} parent=11 // pred_fallthru
        _
    $region12: #{conv_relu.1} parent=5 // pred_fallthru
      _
    %p124 = scmp.lt.s32.totalorder %s9, 2
    // Predicated region
    $region21: #{conv_relu.1} parent=5 // pred_check
      %p125 = pneg %p124
    $region22: #{conv_relu.1} parent=5 // pred_check_branch
      %127 = sbr.rel (%p125) target = $region24
    $region23: #{conv_relu.1} parent=5 // pred_region
      // Predicated region
      $region25: #{conv_relu.1} parent=23 // pred_check
        %p128 = pneg %p29
      $region26: #{conv_relu.1} parent=23 // pred_check_branch
        %130 = sbr.rel (%p128) target = $region28
      $region27: #{conv_relu.1} parent=23 // pred_region
        %p131 = scmp.lt.s32.totalorder %s9, 1
        %s132 = scalar_select %p131, %s9, 1
        %s133 = smul.addr %s132, 2
        %s134 = smul.addr %s133, 8
        %s135 = scalar_lea.vmem %s0, %s134
      $region28: #{conv_relu.1} parent=23 // pred_fallthru
        _
    $region24: #{conv_relu.1} parent=5 // pred_fallthru
      _
    %p136 = scmp.le.s32.totalorder 1, %s9
    %p137 = scmp.lt.s32.totalorder %s9, 3
    %p138 = pnand %p136, %p137
    %p139 = pneg %p138
    // Predicated region
    $region29: #{conv_relu.1} parent=5 // pred_check
      _
    $region30: #{conv_relu.1} parent=5 // pred_check_branch
      %141 = sbr.rel (%p138) target = $region32
    $region31: #{conv_relu.1} parent=5 // pred_region
      %s142 = ssub.s32 %s9, 1
      %p143 = scmp.lt.s32.totalorder %s14, 1
      %s144 = scalar_select %p143, %s14, 1
      %s145 = smul.addr %s144, 2
      %s146 = smul.addr %s145, 8
      %s147 = scalar_lea.vmem %s0, %s146
      %p148 = pneg %p35
      %p149 = pneg %p32
      %p150 = pneg %p56
      %p151 = pneg %p53
      %p152 = pneg %p77
      %p153 = pneg %p74
      %p154 = pneg %p103
      %p155 = pneg %p100
      %p156 = scmp.lt.s32.totalorder %s14, 1
      %s157 = scalar_select %p156, %s14, 1
      %s158 = smul.addr %s157, 2
      %s159 = smul.addr %s158, 8
      %s160 = scalar_lea.vmem %s3, %s159
      %p161 = scmp.lt.s32.totalorder %s14, 1
      %s162 = scalar_select %p161, %s14, 1
      %s163 = smul.addr %s162, 2
      %s164 = smul.addr %s163, 8
      %s165 = scalar_lea.vmem %s0, %s164
      %p166 = scmp.lt.s32.totalorder %s14, 1
      %s167 = scalar_select %p166, %s14, 1
      %s168 = smul.addr %s167, 2
      %s169 = smul.addr %s168, 8
      %s170 = scalar_lea.vmem %s3, %s169
      %v171 = vld [vmem:[%s165] sm:$0xff]
      %v172 = vld [vmem:[%s165 + $0x8] sm:$0xff]
      %vm173 = vcmask 516096
      %174 = vst.msk [vmem:[#allocation2] sm:$0x1] %vm173, 0.0
      %vm177 = vcmask 1040384
      %v178 = vrot.slane %v171, 7
      %v179 = vrot.slane %v172, 7
      %v180 = vsel %vm177, %v178, %v179
      %vm183 = vcmask 523265
      %184 = vst.msk [vmem:[#allocation2] sm:$0xfe] %vm183, %v178
      %vm185 = vcmask 523264
      %186 = vst.msk [vmem:[#allocation2 + $0x10] sm:$0xff] %vm185, %v180
      %187 = vrot.lane.b32.xlu0 %v171, 64
      %v188 = vpop.permute.xlu0 %187
      %189 = vrot.lane.b32.xlu0 %v172, 64
      %v190 = vpop.permute.xlu0 %189
      %vm193 = vcmask 1048064
      %194 = vst.msk [vmem:[#allocation2] sm:$0xff] %vm193, %v188
      %195 = vst.msk [vmem:[#allocation2 + $0x10] sm:$0xff] %vm193, %v190
      %vm196 = vcmask 1046528
      %v197 = vrot.slane %v171, 1
      %v198 = vrot.slane %v172, 1
      %v199 = vsel %vm196, %v197, %v198
      %202 = vst.msk [vmem:[#allocation2 + $0x8] sm:$0xff] %vm185, %v199
      %vm203 = vcmask 522240
      %204 = vst.msk [vmem:[#allocation2 + $0x18] sm:$0x7f] %vm203, %v198
      %205 = vst.msk [vmem:[#allocation2 + $0x1f] sm:$0x1] %vm173, 0.0
      %v206 = vld [vmem:[#allocation2] sm:$0xff]
      %v207 = vld [vmem:[#allocation2 + $0x8] sm:$0xff]
      %v208 = vld [vmem:[#allocation2 + $0x10] sm:$0xff]
      %v209 = vld [vmem:[#allocation2 + $0x18] sm:$0xff]
      %v210 = vld [vmem:[%s1] sm:$0xff]
      %v211 = vld [vmem:[%s1 + $0x8] sm:$0xff]
      %v212 = vld [vmem:[%s1 + $0x10] sm:$0xff]
      %v213 = vld [vmem:[%s1 + $0x18] sm:$0xff]
      %v214 = vld [vmem:[%s1 + $0x20] sm:$0xff]
      %v215 = vld [vmem:[%s1 + $0x28] sm:$0xff]
      %v216 = vld [vmem:[%s1 + $0x30] sm:$0xff]
      %v217 = vld [vmem:[%s1 + $0x38] sm:$0xff]
      %v218 = vld [vmem:[%s1 + $0x40] sm:$0xff]
      %v219 = vld [vmem:[%s1 + $0x48] sm:$0xff]
      %v220 = vld [vmem:[%s1 + $0x50] sm:$0xff]
      %v221 = vld [vmem:[%s1 + $0x58] sm:$0xff]
      %v222 = vld [vmem:[%s1 + $0x60] sm:$0xff]
      %v223 = vld [vmem:[%s1 + $0x68] sm:$0xff]
      %v224 = vld [vmem:[%s1 + $0x70] sm:$0xff]
      %v225 = vld [vmem:[%s1 + $0x78] sm:$0xff]
      %v226 = vld [vmem:[%s1 + $0x80] sm:$0xff]
      %v227 = vld [vmem:[%s1 + $0x88] sm:$0xff]
      %v228 = vld [vmem:[%s1 + $0x90] sm:$0xff]
      %v229 = vld [vmem:[%s1 + $0x98] sm:$0xff]
      %v230 = vld [vmem:[%s1 + $0xa0] sm:$0xff]
      %v231 = vld [vmem:[%s1 + $0xa8] sm:$0xff]
      %v232 = vld [vmem:[%s1 + $0xb0] sm:$0xff]
      %v233 = vld [vmem:[%s1 + $0xb8] sm:$0xff]
      %v234 = vld [vmem:[%s2] sm:$0x1]
      %v236 = vlaneseq
      %v237 = vshrl.u32 %v236, 7
      %v238 = vsub.s32 0, %v237
      %v239 = vrot.slane %v234, %v238
      %v242 = vsel %vm185, %v207, 0
      %v245 = vsel %vm185, %v209, 0
      %247 = vmatprep.subr.mxu0 0.0
      %248 = vmatpush1.msra.mxu0 %v225
      %249 = vmatprep.subr.mxu0 0.0
      %250 = vmatpush1.msra.mxu0 %v224
      %251 = vmatprep.subr.mxu0 0.0
      %252 = vmatpush1.msra.mxu0 %v223
      %253 = vmatprep.subr.mxu0 0.0
      %254 = vmatpush1.msra.mxu0 %v222
      %255 = vmatprep.subr.mxu0 0.0
      %256 = vmatpush1.msra.mxu0 %v221
      %257 = vmatprep.subr.mxu0 0.0
      %258 = vmatpush1.msra.mxu0 %v220
      %259 = vmatprep.subr.mxu0 0.0
      %260 = vmatpush1.msra.mxu0 %v219
      %261 = vmatprep.subr.mxu0 0.0
      %262 = vmatpush1.msra.mxu0 %v218
      %263 = vmatprep.subr.mxu0 0.0
      %264 = vmatpush1.msra.mxu0 %v217
      %265 = vmatprep.subr.mxu0 0.0
      %266 = vmatpush1.msra.mxu0 %v216
      %267 = vmatprep.subr.mxu0 0.0
      %268 = vmatpush1.msra.mxu0 %v215
      %269 = vmatprep.subr.mxu0 0.0
      %270 = vmatpush1.msra.mxu0 %v214
      %271 = vmatprep.subr.mxu0 0.0
      %272 = vmatpush1.msra.mxu0 %v213
      %273 = vmatprep.subr.mxu0 0.0
      %274 = vmatpush1.msra.mxu0 %v212
      %275 = vmatprep.subr.mxu0 0.0
      %276 = vmatpush1.msra.mxu0 %v211
      %277 = vmatprep.subr.mxu0 0.0
      %278 = vmatpush1.msra.mxu0 %v210
      %279 = vmatprep.subr.mxu0 0.0
      %280 = vmatpush2.msra.mxu0 0.0
      %281 = vmatprep.subr.mxu0 0.0
      %282 = vmatpush2.msra.mxu0 0.0
      %283 = vmatprep.subr.mxu0 0.0
      %284 = vmatpush2.msra.mxu0 0.0
      %285 = vmatprep.subr.mxu0 0.0
      %286 = vmatpush2.msra.mxu0 0.0
      %287 = vmatprep.subr.mxu0 0.0
      %288 = vmatpush2.msra.mxu0 0.0
      %289 = vmatprep.subr.mxu0 0.0
      %290 = vmatpush2.msra.mxu0 0.0
      %291 = vmatprep.subr.mxu0 0.0
      %292 = vmatpush2.msra.mxu0 0.0
      %293 = vmatprep.subr.mxu0 0.0
      %294 = vmatpush2.msra.mxu0 0.0
      %295 = vmatprep.subr.mxu0 0.0
      %296 = vmatpush2.msra.mxu0 %v233
      %297 = vmatprep.subr.mxu0 0.0
      %298 = vmatpush2.msra.mxu0 %v232
      %299 = vmatprep.subr.mxu0 0.0
      %300 = vmatpush2.msra.mxu0 %v231
      %301 = vmatprep.subr.mxu0 0.0
      %302 = vmatpush2.msra.mxu0 %v230
      %303 = vmatprep.subr.mxu0 0.0
      %304 = vmatpush2.msra.mxu0 %v229
      %305 = vmatprep.subr.mxu0 0.0
      %306 = vmatpush2.msra.mxu0 %v228
      %307 = vmatprep.subr.mxu0 0.0
      %308 = vmatpush2.msra.mxu0 %v227
      %309 = vmatprep.subr.mxu0 0.0
      %310 = vmatpush2.msra.mxu0 %v226
      %311 = vmatprep.mubr.f32.mxu0 %v242
      %312 = vmatmul.mubr.f32.gmra.mxu0 %v206
      %v313 = vpop.f32.mrf.mxu0
      %v314 = vadd.f32 %v239, %v313
      %v315 = vpop.f32.mrf.mxu0
      %316 = vmatprep.mubr.f32.mxu0 %v245
      %317 = vmatmul.mubr.f32.gmra.mxu0 %v208
      %v318 = vpop.f32.mrf.mxu0
      %v319 = vadd.f32 %v239, %v318
      %v320 = vpop.f32.mrf.mxu0
      %321 = vdwg.mxu0
      %v322 = vmax.f32 %v314, 0.0
      %v323 = vmax.f32 %v319, 0.0
      %324 = vst [vmem:[%s170] sm:$0xff] %v322
      %325 = vst [vmem:[%s170 + $0x8] sm:$0xff] %v323
      %p326 = scmp.lt.s32.totalorder %s14, 1
      %s327 = scalar_select %p326, %s14, 1
      %s328 = smul.addr %s327, 2
      %s329 = smul.addr %s328, 8
      %s330 = scalar_lea.vmem %s3, %s329
      // Predicated region
      $region33: #{conv_relu.1} parent=31 // pred_check
        %p331 = pneg %p100
      $region34: #{conv_relu.1} parent=31 // pred_check_branch
        %333 = sbr.rel (%p331) target = $region36
      $region35: #{conv_relu.1} parent=31 // pred_region
        _
      $region36: #{conv_relu.1} parent=31 // pred_fallthru
        _
    $region32: #{conv_relu.1} parent=5 // pred_fallthru
      _
    %p334 = scmp.le.s32.totalorder 2, %s9
    // Predicated region
    $region37: #{conv_relu.1} parent=5 // pred_check
      %p335 = pneg %p334
    $region38: #{conv_relu.1} parent=5 // pred_check_branch
      %337 = sbr.rel (%p335) target = $region40
    $region39: #{conv_relu.1} parent=5 // pred_region
      %s338 = ssub.s32 %s9, 2
      // Predicated region
      $region41: #{conv_relu.1} parent=39 // pred_check
        %p339 = pneg %p106
      $region42: #{conv_relu.1} parent=39 // pred_check_branch
        %341 = sbr.rel (%p339) target = $region44
      $region43: #{conv_relu.1} parent=39 // pred_region
        %p342 = scmp.lt.s32.totalorder %s15, 1
        %s343 = scalar_select %p342, %s15, 1
        %s344 = smul.addr %s343, 2
        %s345 = smul.addr %s344, 8
        %s346 = scalar_lea.vmem %s3, %s345
      $region44: #{conv_relu.1} parent=39 // pred_fallthru
        _
    $region40: #{conv_relu.1} parent=5 // pred_fallthru
      _
  $region6: #{conv_relu.1} parent=0 // loop_footer
    %s13 = sadd.s32 1, %s9
  $region7: #{conv_relu.1} parent=0 // loop_footer_branch
    %8 = sbr.rel target = $region3
  $region8: #{conv_relu.1} parent=0 // loop_exit
    _

</llo_original>
